<compile_context>
chip_gen: v7x
topology: tpu7x:2x2x1
jax: 0.10.0
libtpu: 0.0.40
codegen_flags: <defaults>
</compile_context>

<pallas_src>
import functools

import jax
import jax.numpy as jnp
from jax.experimental import pallas as pl
from jax.experimental.pallas import tpu as pltpu


def _round_up(x: int, m: int) -> int:
    return ((x + m - 1) // m) * m


def _irc_kernel(adj_ref, x_ref, o_ref, *scratch, reduce: str, k_tiled: bool):
    """adj_ref: (tb, ti, tk); x_ref: (tb, tk, Fp); o_ref: (tb, ti, Fp)."""
    adj = adj_ref[...]          # native dtype straight to the MXU, no VPU casts
    x = x_ref[...]

    # Partial product on the MXU with f32 accumulation (batched matmul).
    part = jnp.einsum("bij,bjf->bif", adj, x,
                      preferred_element_type=jnp.float32)

    if reduce == "mean":
        # Row boundary counts: XLU reduce, f32 accumulation. Padded columns
        # are zero so the count is exact.
        den = jnp.sum(adj, axis=-1, dtype=jnp.float32, keepdims=True)  # (tb, ti, 1)

    if not k_tiled:
        if reduce == "mean":
            # diag(1/den) @ (A @ X) == (A/den) @ X ; exact reciprocal on the
            # tiny (tb, ti, 1) vector keeps full precision (no approx).
            part = part * (1.0 / jnp.maximum(den, 1.0))
        o_ref[...] = part.astype(o_ref.dtype)
    else:
        acc_ref = scratch[0]
        k = pl.program_id(2)

        @pl.when(k == 0)
        def _init():
            acc_ref[...] = jnp.zeros_like(acc_ref)
            if reduce == "mean":
                scratch[1][...] = jnp.zeros_like(scratch[1])

        acc_ref[...] += part
        if reduce == "mean":
            scratch[1][...] += den

        @pl.when(k == pl.num_programs(2) - 1)
        def _finalize():
            out = acc_ref[...]
            if reduce == "mean":
                out = out * (1.0 / jnp.maximum(scratch[1][...], 1.0))
            o_ref[...] = out.astype(o_ref.dtype)


def init_reduce_conv(boundary_x: jax.Array, boundary_adj: jax.Array,
                     *, reduce: str = "add") -> jax.Array:
    """out[b] = weight(boundary_adj[b]) @ boundary_x[b]."""
    B, Nj, F = boundary_x.shape
    Bb, Ni, Nj2 = boundary_adj.shape
    assert B == Bb and Nj == Nj2, (boundary_x.shape, boundary_adj.shape)

    out_dtype = boundary_x.dtype

    # HBM-bound on adj reads: carry adj at x's (narrower) width when x is low
    # precision. 0/1 incidence entries are exact in bf16, and the 'mean'
    # normalization now happens after the matmul in f32, so no precision loss.
    if boundary_adj.dtype.itemsize > boundary_x.dtype.itemsize:
        boundary_adj = boundary_adj.astype(boundary_x.dtype)

    adj_b = boundary_adj.dtype.itemsize
    x_b = boundary_x.dtype.itemsize
    out_b = x_b

    # Lane-dense padded dims (zero padding -> contributes nothing, sliced off).
    Fp = _round_up(F, 128)
    Njp = _round_up(Nj, 128)

    # ---- VMEM budget (per generation) -----------------------------------
    try:
        vmem_cap = int(pltpu.get_tpu_info().vmem_capacity_bytes)
    except Exception:
        vmem_cap = 64 * 1024 * 1024          # conservative default (v7x per-TC)
    vmem_limit = min(vmem_cap * 3 // 4, 128 * 1024 * 1024)
    budget = int(vmem_limit * 0.7)           # headroom for Mosaic internals

    def fits(tb, ti, tk, k_tiled):
        blocks = 2 * (tb * ti * tk * adj_b     # adj block, double buffered
                      + tb * tk * Fp * x_b     # x block
                      + tb * ti * Fp * out_b)  # out block
        if k_tiled:
            blocks += tb * ti * Fp * 4 + tb * ti * 4   # acc + denom scratch
        return blocks <= budget

    # ---- tile selection ---------------------------------------------------
    # Prefer full Ni, then MXU-friendly multiples of 256/128, floor at 8.
    i_cands = [Ni] + [t for t in (4096, 2048, 1024, 512, 256, 128, 64, 32, 16, 8)
                      if t < Ni]
    k_cands = [Njp] + [t for t in (8192, 4096, 2048, 1024, 512, 256, 128)
                       if t < Njp]

    tile_b, tile_i, tile_k, k_tiled = 1, None, None, False
    for ti in i_cands:                       # prefer full-Nj contraction (no acc)
        if fits(1, ti, Njp, False):
            tile_i, tile_k = ti, Njp
            break
    if tile_i is None:                       # fall back to a k-tiled accumulator
        k_tiled = True
        for ti in i_cands:
            for tk in k_cands:
                if fits(1, ti, tk, True):
                    tile_i, tile_k = ti, tk
                    break
            if tile_i is not None:
                break
    if tile_i is None:
        # TODO(synk): F is not tiled; extremely wide feature dims could still
        # exceed the VMEM budget here.
        tile_i, tile_k, k_tiled = min(Ni, 8), min(Njp, 128), True

    # Batch several samples per grid step when per-sample blocks are tiny.
    SMALL = 1 << 20
    if (not k_tiled and tile_i == Ni and B > 1
            and Ni * Njp * adj_b < SMALL and Njp * Fp * x_b < SMALL):
        while tile_b * 2 <= B and fits(tile_b * 2, Ni, Njp, False):
            tile_b *= 2

    # Make the contraction padding a multiple of tile_k so partial k blocks
    # never pull unspecified data into the accumulator.
    if k_tiled:
        Njp = _round_up(Nj, tile_k)
    else:
        tile_k = Njp

    # ---- padding ----------------------------------------------------------
    xp, adjp = boundary_x, boundary_adj
    if Fp != F:
        xp = jnp.pad(xp, ((0, 0), (0, 0), (0, Fp - F)))
    if Njp != Nj:
        xp = jnp.pad(xp, ((0, 0), (0, Njp - Nj), (0, 0)))
        adjp = jnp.pad(adjp, ((0, 0), (0, 0), (0, Njp - Nj)))

    # ---- grid / specs -----------------------------------------------------
    grid_b = pl.cdiv(B, tile_b)
    grid_i = pl.cdiv(Ni, tile_i)

    kernel = functools.partial(_irc_kernel, reduce=reduce, k_tiled=k_tiled)

    if not k_tiled:
        grid = (grid_b, grid_i)
        in_specs = [
            pl.BlockSpec((tile_b, tile_i, Njp), lambda b, i: (b, i, 0)),   # adj
            pl.BlockSpec((tile_b, Njp, Fp), lambda b, i: (b, 0, 0)),       # x (reused over i)
        ]
        out_specs = pl.BlockSpec((tile_b, tile_i, Fp), lambda b, i: (b, i, 0))
        scratch_shapes = []
        dims = ("parallel", "parallel")
    else:
        grid = (grid_b, grid_i, Njp // tile_k)        # reduction axis innermost
        in_specs = [
            pl.BlockSpec((tile_b, tile_i, tile_k), lambda b, i, k: (b, i, k)),
            pl.BlockSpec((tile_b, tile_k, Fp), lambda b, i, k: (b, k, 0)),
        ]
        out_specs = pl.BlockSpec((tile_b, tile_i, Fp), lambda b, i, k: (b, i, 0))
        scratch_shapes = [pltpu.VMEM((tile_b, tile_i, Fp), jnp.float32)]
        if reduce == "mean":
            scratch_shapes.append(pltpu.VMEM((tile_b, tile_i, 1), jnp.float32))
        dims = ("parallel", "parallel", "arbitrary")

    cost = pl.CostEstimate(
        flops=2 * B * Ni * Njp * Fp,
        transcendentals=0,
        bytes_accessed=(B * Ni * Njp * adj_b + B * Njp * Fp * x_b
                        + B * Ni * Fp * out_b),
    )

    out = pl.pallas_call(
        kernel,
        out_shape=jax.ShapeDtypeStruct((B, Ni, Fp), out_dtype),
        grid=grid,
        in_specs=in_specs,
        out_specs=out_specs,
        scratch_shapes=scratch_shapes,
        compiler_params=pltpu.CompilerParams(
            dimension_semantics=dims,
            vmem_limit_bytes=int(vmem_limit),
        ),
        cost_estimate=cost,
    )(adjp, xp)

    if Fp != F:
        out = out[..., :F]
    return out


class InitReduceConv:
    """JAX/Pallas port of mp.dense_tgaa_layers.InitReduceConv."""

    def __init__(self, reduce: str = "add"):
        if reduce in ("add", "sum"):
            self.reduce = "add"
        elif reduce == "mean":
            # TODO(synk): exact create_sb_weight source not in the spec; 'mean'
            # is implemented as row-normalization by the clamped (>=1) boundary
            # count (the standard dense-CWN weighting).
            self.reduce = "mean"
        else:
            # 'min'/'max' are not expressible as the adjacency matmul this
            # module computes.
            raise NotImplementedError(f"reduce={reduce!r} not supported")

    def __call__(self, boundary_x: jax.Array, boundary_adj: jax.Array) -> jax.Array:
        return init_reduce_conv(boundary_x, boundary_adj, reduce=self.reduce)


if __name__ == "__main__":
    key = jax.random.PRNGKey(0)
    kx, ka = jax.random.split(key)

    # Small shapes consistent with the module: batch=2, N_i=16 upper cells,
    # N_j=24 boundary cells, hidden=32 features.
    B, Ni, Nj, F = 2, 16, 24, 32
    boundary_x = jax.random.normal(kx, (B, Nj, F), dtype=jnp.float32)
    boundary_adj = (jax.random.uniform(ka, (B, Ni, Nj)) < 0.3).astype(jnp.float32)

    # reduce='add' (default)
    out_add = jax.block_until_ready(InitReduceConv("add")(boundary_x, boundary_adj))
    ref_add = jnp.einsum("bij,bjf->bif", boundary_adj, boundary_x)
    assert out_add.shape == (B, Ni, F) and out_add.dtype == boundary_x.dtype
    assert jnp.allclose(out_add, ref_add, rtol=1e-4, atol=1e-4)

    # reduce='mean'
    out_mean = jax.block_until_ready(InitReduceConv("mean")(boundary_x, boundary_adj))
    denom = jnp.maximum(boundary_adj.sum(-1, keepdims=True), 1.0)
    ref_mean = jnp.einsum("bij,bjf->bif", boundary_adj / denom, boundary_x)
    assert jnp.allclose(out_mean, ref_mean, rtol=1e-4, atol=1e-4)

    print("KERNEL_OK")
</pallas_src>

<mosaic_0001>
module attributes {stable_mosaic.version = 11 : i64} {
  func.func @_irc_kernel(%arg0: i32, %arg1: i32, %arg2: memref<2x16x128xf32, #tpu.memory_space<vmem>>, %arg3: memref<2x128x128xf32, #tpu.memory_space<vmem>>, %arg4: memref<2x16x128xf32, #tpu.memory_space<vmem>>) attributes {dimension_semantics = [#tpu.dimension_semantics<parallel>, #tpu.dimension_semantics<parallel>], iteration_bounds = array<i64: 1, 1>, scalar_prefetch = 0 : i64, scratch_operands = 0 : i64, tpu.core_type = #tpu.core_type<tc>, window_params = [{transform_indices = @transform_0, window_bounds = array<i64: 2, 16, 128>}, {transform_indices = @transform_1, window_bounds = array<i64: 2, 128, 128>}, {transform_indices = @transform_2, window_bounds = array<i64: 2, 16, 128>}]} {
    %c0 = arith.constant 0 : index
    %c0_0 = arith.constant 0 : index
    %c0_1 = arith.constant 0 : index
    %0 = vector.load %arg2[%c0, %c0_0, %c0_1] : memref<2x16x128xf32, #tpu.memory_space<vmem>>, vector<2x16x128xf32>
    %c0_2 = arith.constant 0 : index
    %c0_3 = arith.constant 0 : index
    %c0_4 = arith.constant 0 : index
    %1 = vector.load %arg3[%c0_2, %c0_3, %c0_4] : memref<2x128x128xf32, #tpu.memory_space<vmem>>, vector<2x128x128xf32>
    "tpu.trace_start"() <{level = 10 : i32, message = "bij,bjf->bif"}> : () -> ()
    %cst = arith.constant dense<0.000000e+00> : vector<2x16x128xf32>
    %2 = tpu.matmul %0, %1, %cst {dimension_numbers = #tpu.dot_dimension_numbers<[2], [1], [1], [2], [0, 0, 0, 1, 1, 2], [0], [0]>} : vector<2x16x128xf32>, vector<2x128x128xf32>, vector<2x16x128xf32> -> vector<2x16x128xf32>
    "tpu.trace_stop"() : () -> ()
    %c0_5 = arith.constant 0 : index
    %c0_6 = arith.constant 0 : index
    %c0_7 = arith.constant 0 : index
    %3 = vector.load %arg4[%c0_5, %c0_6, %c0_7] : memref<2x16x128xf32, #tpu.memory_space<vmem>>, vector<2x16x128xf32>
    tpu.vector_store %arg4[%c0_5, %c0_6, %c0_7], %2 {strides = array<i32>} : memref<2x16x128xf32, #tpu.memory_space<vmem>>, vector<2x16x128xf32>,
    return
  }
  func.func @transform_0(%arg0: i32, %arg1: i32) -> (i32, i32, i32) {
    %c0_i32 = arith.constant 0 : i32
    %c0_i32_0 = arith.constant 0 : i32
    return %arg0, %arg1, %c0_i32 : i32, i32, i32
  }
  func.func @transform_1(%arg0: i32, %arg1: i32) -> (i32, i32, i32) {
    %c0_i32 = arith.constant 0 : i32
    %c0_i32_0 = arith.constant 0 : i32
    %c0_i32_1 = arith.constant 0 : i32
    return %arg0, %c0_i32, %c0_i32_0 : i32, i32, i32
  }
  func.func @transform_2(%arg0: i32, %arg1: i32) -> (i32, i32, i32) {
    %c0_i32 = arith.constant 0 : i32
    %c0_i32_0 = arith.constant 0 : i32
    return %arg0, %arg1, %c0_i32 : i32, i32, i32
  }
}

</mosaic_0001>

<llo_original>
// kernel: tpu_custom_call.1
$region0: #{tpu_custom_call.1}
  #allocation0 [shape = 'u32[]', space=smem, size = 0x4, offset = 0x4, fixed_abs, tag = 'smem constant byte address 0x4 - core index']
  #allocation1 [shape = 'u32[144,128]{1,0:T(1,128)}', space=vmem, size = 0x12000, scoped, tag = 'internal scratch']
  %s0 = inlined_call_operand.hbm [shape: f32[2,16,128], index: 0, kind: input, shape index: {}]
  %s1 = inlined_call_operand.hbm [shape: f32[2,128,128], index: 1, kind: input, shape index: {}]
  %s2 = inlined_call_operand.hbm [shape: f32[2,16,128], index: 2, kind: output, shape index: {}]
  %s3 = sld [smem:[#allocation0]]
  $region26: #{tpu_custom_call.1} parent=0
    _
  %s5 = ssub.s32 1, %s3
  %s6 = scalar_select 0, %s5, %s3
  $region1: #{tpu_custom_call.1} parent=0
    #allocation2 [shape = 'u8[16384]{0}', space=vmem, size = 0x4000, scoped, tag = 'input window, operand 0, single buffered']
    #allocation3 [shape = 's32[1]{0}', space=sflag, size = 0x4, scoped, tag = 'scoped memory for tpu_custom_call.1']
    #allocation4 [shape = 's32[1]{0}', space=sflag, size = 0x4, scoped, tag = 'scoped memory for tpu_custom_call.1']
    #allocation5 [shape = 'u8[131072]{0}', space=vmem, size = 0x20000, scoped, tag = 'input window, operand 1, single buffered']
    #allocation6 [shape = 's32[1]{0}', space=sflag, size = 0x4, scoped, tag = 'scoped memory for tpu_custom_call.1']
    #allocation7 [shape = 'u8[16384]{0}', space=vmem, size = 0x4000, scoped, tag = 'output window, operand 0, single buffered']
    %7 = vsyncpa [#allocation3], 0
    %8 = vsyncpa [#allocation6], 0
    %9 = vsyncpa [#allocation4], 0
    // Predicated region
    $region2: #{tpu_custom_call.1} parent=1 // pred_check
      _
    $region3: #{tpu_custom_call.1} parent=1 // pred_check_branch
      %11 = sbr.rel (0) target = $region5
    $region4: #{tpu_custom_call.1} parent=1 // pred_region
      %s13 = ssub.s32 512, 512
      %14 = vsyncadd [#allocation3], %s13
      %s15 = sshll.u32 [#allocation2], 4
      %s16 = int_to_ptr.vmem [resolvable:$true] %s15
      %21 = dma.hbm_to_vmem [thread:$0]  %s0, 512, %s16, [#allocation3], 128, 128, 8
    $region5: #{tpu_custom_call.1} parent=1 // pred_fallthru
      _
    // Predicated region
    $region6: #{tpu_custom_call.1} parent=1 // pred_check
      _
    $region7: #{tpu_custom_call.1} parent=1 // pred_check_branch
      %23 = sbr.rel (0) target = $region9
    $region8: #{tpu_custom_call.1} parent=1 // pred_region
      %s25 = ssub.s32 4096, 4096
      %26 = vsyncadd [#allocation6], %s25
      %s27 = sshll.u32 [#allocation5], 4
      %s28 = int_to_ptr.vmem [resolvable:$true] %s27
      %33 = dma.hbm_to_vmem [thread:$0]  %s1, 4096, %s28, [#allocation6], 128, 128, 8
    $region9: #{tpu_custom_call.1} parent=1 // pred_fallthru
      _
    // Predicated region
    $region10: #{tpu_custom_call.1} parent=1 // pred_check
      _
    $region11: #{tpu_custom_call.1} parent=1 // pred_check_branch
      %35 = sbr.rel (0) target = $region13
    $region12: #{tpu_custom_call.1} parent=1 // pred_region
      %36 = dma.done [#allocation3], 512
    $region13: #{tpu_custom_call.1} parent=1 // pred_fallthru
      _
    // Predicated region
    $region14: #{tpu_custom_call.1} parent=1 // pred_check
      _
    $region15: #{tpu_custom_call.1} parent=1 // pred_check_branch
      %38 = sbr.rel (0) target = $region17
    $region16: #{tpu_custom_call.1} parent=1 // pred_region
      %39 = dma.done [#allocation6], 4096
    $region17: #{tpu_custom_call.1} parent=1 // pred_fallthru
      _
    %v40 = vld [vmem:[#allocation2] sm:$0xff]
    %v41 = vld [vmem:[#allocation2 + $0x8] sm:$0xff]
    %v42 = vld [vmem:[#allocation2 + $0x10] sm:$0xff]
    %v43 = vld [vmem:[#allocation2 + $0x18] sm:$0xff]
    %v44 = vld [vmem:[#allocation5] sm:$0xff]
    %v45 = vld [vmem:[#allocation5 + $0x8] sm:$0xff]
    %v46 = vld [vmem:[#allocation5 + $0x10] sm:$0xff]
    %v47 = vld [vmem:[#allocation5 + $0x18] sm:$0xff]
    %v48 = vld [vmem:[#allocation5 + $0x20] sm:$0xff]
    %v49 = vld [vmem:[#allocation5 + $0x28] sm:$0xff]
    %v50 = vld [vmem:[#allocation5 + $0x30] sm:$0xff]
    %v51 = vld [vmem:[#allocation5 + $0x38] sm:$0xff]
    %v52 = vld [vmem:[#allocation5 + $0x40] sm:$0xff]
    %v53 = vld [vmem:[#allocation5 + $0x48] sm:$0xff]
    %v54 = vld [vmem:[#allocation5 + $0x50] sm:$0xff]
    %v55 = vld [vmem:[#allocation5 + $0x58] sm:$0xff]
    %v56 = vld [vmem:[#allocation5 + $0x60] sm:$0xff]
    %v57 = vld [vmem:[#allocation5 + $0x68] sm:$0xff]
    %v58 = vld [vmem:[#allocation5 + $0x70] sm:$0xff]
    %v59 = vld [vmem:[#allocation5 + $0x78] sm:$0xff]
    %v60 = vld [vmem:[#allocation5 + $0x80] sm:$0xff]
    %v61 = vld [vmem:[#allocation5 + $0x88] sm:$0xff]
    %v62 = vld [vmem:[#allocation5 + $0x90] sm:$0xff]
    %v63 = vld [vmem:[#allocation5 + $0x98] sm:$0xff]
    %v64 = vld [vmem:[#allocation5 + $0xa0] sm:$0xff]
    %v65 = vld [vmem:[#allocation5 + $0xa8] sm:$0xff]
    %v66 = vld [vmem:[#allocation5 + $0xb0] sm:$0xff]
    %v67 = vld [vmem:[#allocation5 + $0xb8] sm:$0xff]
    %v68 = vld [vmem:[#allocation5 + $0xc0] sm:$0xff]
    %v69 = vld [vmem:[#allocation5 + $0xc8] sm:$0xff]
    %v70 = vld [vmem:[#allocation5 + $0xd0] sm:$0xff]
    %v71 = vld [vmem:[#allocation5 + $0xd8] sm:$0xff]
    %v72 = vld [vmem:[#allocation5 + $0xe0] sm:$0xff]
    %v73 = vld [vmem:[#allocation5 + $0xe8] sm:$0xff]
    %v74 = vld [vmem:[#allocation5 + $0xf0] sm:$0xff]
    %v75 = vld [vmem:[#allocation5 + $0xf8] sm:$0xff]
    %76 = vmatprep.subr.mxu0 0.0
    %77 = vmatpush1.msra.mxu0 %v44
    %78 = vmatprep.subr.mxu0 0.0
    %79 = vmatpush1.msra.mxu0 %v45
    %80 = vmatprep.subr.mxu0 0.0
    %81 = vmatpush1.msra.mxu0 %v46
    %82 = vmatprep.subr.mxu0 0.0
    %83 = vmatpush1.msra.mxu0 %v47
    %84 = vmatprep.subr.mxu0 0.0
    %85 = vmatpush1.msra.mxu0 %v48
    %86 = vmatprep.subr.mxu0 0.0
    %87 = vmatpush1.msra.mxu0 %v49
    %88 = vmatprep.subr.mxu0 0.0
    %89 = vmatpush1.msra.mxu0 %v50
    %90 = vmatprep.subr.mxu0 0.0
    %91 = vmatpush1.msra.mxu0 %v51
    %92 = vmatprep.subr.mxu0 0.0
    %93 = vmatpush1.msra.mxu0 %v52
    %94 = vmatprep.subr.mxu0 0.0
    %95 = vmatpush1.msra.mxu0 %v53
    %96 = vmatprep.subr.mxu0 0.0
    %97 = vmatpush1.msra.mxu0 %v54
    %98 = vmatprep.subr.mxu0 0.0
    %99 = vmatpush1.msra.mxu0 %v55
    %100 = vmatprep.subr.mxu0 0.0
    %101 = vmatpush1.msra.mxu0 %v56
    %102 = vmatprep.subr.mxu0 0.0
    %103 = vmatpush1.msra.mxu0 %v57
    %104 = vmatprep.subr.mxu0 0.0
    %105 = vmatpush1.msra.mxu0 %v58
    %106 = vmatprep.subr.mxu0 0.0
    %107 = vmatpush1.msra.mxu0 %v59
    %108 = vmatprep.subr.mxu0 0.0
    %109 = vmatpush1.msra.mxu0 0.0
    %110 = vmatprep.subr.mxu0 0.0
    %111 = vmatpush1.msra.mxu0 0.0
    %112 = vmatprep.subr.mxu0 0.0
    %113 = vmatpush1.msra.mxu0 0.0
    %114 = vmatprep.subr.mxu0 0.0
    %115 = vmatpush1.msra.mxu0 0.0
    %116 = vmatprep.subr.mxu0 0.0
    %117 = vmatpush1.msra.mxu0 0.0
    %118 = vmatprep.subr.mxu0 0.0
    %119 = vmatpush1.msra.mxu0 0.0
    %120 = vmatprep.subr.mxu0 0.0
    %121 = vmatpush1.msra.mxu0 0.0
    %122 = vmatprep.subr.mxu0 0.0
    %123 = vmatpush1.msra.mxu0 0.0
    %124 = vmatprep.subr.mxu0 0.0
    %125 = vmatpush1.msra.mxu0 0.0
    %126 = vmatprep.subr.mxu0 0.0
    %127 = vmatpush1.msra.mxu0 0.0
    %128 = vmatprep.subr.mxu0 0.0
    %129 = vmatpush1.msra.mxu0 0.0
    %130 = vmatprep.subr.mxu0 0.0
    %131 = vmatpush1.msra.mxu0 0.0
    %132 = vmatprep.subr.mxu0 0.0
    %133 = vmatpush1.msra.mxu0 0.0
    %134 = vmatprep.subr.mxu0 0.0
    %135 = vmatpush1.msra.mxu0 0.0
    %136 = vmatprep.subr.mxu0 0.0
    %137 = vmatpush1.msra.mxu0 0.0
    %138 = vmatprep.subr.mxu0 0.0
    %139 = vmatpush1.msra.mxu0 0.0
    %140 = vmatprep.mubr.f32.mxu0 0.0
    %141 = vmatmul.mubr.f32.gmra.mrb[0].mxu0 %v40
    %v142 = vpop.f32.mrb[0].mxu0
    %v143 = vadd.f32 0.0, %v142
    %v144 = vpop.f32.mrb[0].mxu0
    %145 = vmatprep.mubr.f32.mxu0 0.0
    %146 = vmatmul.mubr.f32.gmra.mrb[0].mxu0 %v41
    %v147 = vpop.f32.mrb[0].mxu0
    %v148 = vadd.f32 0.0, %v147
    %v149 = vpop.f32.mrb[0].mxu0
    %150 = vdwg.mxu0
    %151 = vmatprep.subr.mxu0 0.0
    %152 = vmatpush1.msra.mxu0 %v60
    %153 = vmatprep.subr.mxu0 0.0
    %154 = vmatpush1.msra.mxu0 %v61
    %155 = vmatprep.subr.mxu0 0.0
    %156 = vmatpush1.msra.mxu0 %v62
    %157 = vmatprep.subr.mxu0 0.0
    %158 = vmatpush1.msra.mxu0 %v63
    %159 = vmatprep.subr.mxu0 0.0
    %160 = vmatpush1.msra.mxu0 %v64
    %161 = vmatprep.subr.mxu0 0.0
    %162 = vmatpush1.msra.mxu0 %v65
    %163 = vmatprep.subr.mxu0 0.0
    %164 = vmatpush1.msra.mxu0 %v66
    %165 = vmatprep.subr.mxu0 0.0
    %166 = vmatpush1.msra.mxu0 %v67
    %167 = vmatprep.subr.mxu0 0.0
    %168 = vmatpush1.msra.mxu0 %v68
    %169 = vmatprep.subr.mxu0 0.0
    %170 = vmatpush1.msra.mxu0 %v69
    %171 = vmatprep.subr.mxu0 0.0
    %172 = vmatpush1.msra.mxu0 %v70
    %173 = vmatprep.subr.mxu0 0.0
    %174 = vmatpush1.msra.mxu0 %v71
    %175 = vmatprep.subr.mxu0 0.0
    %176 = vmatpush1.msra.mxu0 %v72
    %177 = vmatprep.subr.mxu0 0.0
    %178 = vmatpush1.msra.mxu0 %v73
    %179 = vmatprep.subr.mxu0 0.0
    %180 = vmatpush1.msra.mxu0 %v74
    %181 = vmatprep.subr.mxu0 0.0
    %182 = vmatpush1.msra.mxu0 %v75
    %183 = vmatprep.subr.mxu0 0.0
    %184 = vmatpush1.msra.mxu0 0.0
    %185 = vmatprep.subr.mxu0 0.0
    %186 = vmatpush1.msra.mxu0 0.0
    %187 = vmatprep.subr.mxu0 0.0
    %188 = vmatpush1.msra.mxu0 0.0
    %189 = vmatprep.subr.mxu0 0.0
    %190 = vmatpush1.msra.mxu0 0.0
    %191 = vmatprep.subr.mxu0 0.0
    %192 = vmatpush1.msra.mxu0 0.0
    %193 = vmatprep.subr.mxu0 0.0
    %194 = vmatpush1.msra.mxu0 0.0
    %195 = vmatprep.subr.mxu0 0.0
    %196 = vmatpush1.msra.mxu0 0.0
    %197 = vmatprep.subr.mxu0 0.0
    %198 = vmatpush1.msra.mxu0 0.0
    %199 = vmatprep.subr.mxu0 0.0
    %200 = vmatpush1.msra.mxu0 0.0
    %201 = vmatprep.subr.mxu0 0.0
    %202 = vmatpush1.msra.mxu0 0.0
    %203 = vmatprep.subr.mxu0 0.0
    %204 = vmatpush1.msra.mxu0 0.0
    %205 = vmatprep.subr.mxu0 0.0
    %206 = vmatpush1.msra.mxu0 0.0
    %207 = vmatprep.subr.mxu0 0.0
    %208 = vmatpush1.msra.mxu0 0.0
    %209 = vmatprep.subr.mxu0 0.0
    %210 = vmatpush1.msra.mxu0 0.0
    %211 = vmatprep.subr.mxu0 0.0
    %212 = vmatpush1.msra.mxu0 0.0
    %213 = vmatprep.subr.mxu0 0.0
    %214 = vmatpush1.msra.mxu0 0.0
    %215 = vmatprep.mubr.f32.mxu0 0.0
    %216 = vmatmul.mubr.f32.gmra.mrb[0].mxu0 %v42
    %v217 = vpop.f32.mrb[0].mxu0
    %v218 = vadd.f32 0.0, %v217
    %v219 = vpop.f32.mrb[0].mxu0
    %220 = vmatprep.mubr.f32.mxu0 0.0
    %221 = vmatmul.mubr.f32.gmra.mrb[0].mxu0 %v43
    %v222 = vpop.f32.mrb[0].mxu0
    %v223 = vadd.f32 0.0, %v222
    %v224 = vpop.f32.mrb[0].mxu0
    %225 = vdwg.mxu0
    %226 = vst [vmem:[#allocation7] sm:$0xff] %v143
    %227 = vst [vmem:[#allocation7 + $0x8] sm:$0xff] %v148
    %228 = vst [vmem:[#allocation7 + $0x10] sm:$0xff] %v218
    %229 = vst [vmem:[#allocation7 + $0x18] sm:$0xff] %v223
    // Predicated region
    $region18: #{tpu_custom_call.1} parent=1 // pred_check
      _
    $region19: #{tpu_custom_call.1} parent=1 // pred_check_branch
      %231 = sbr.rel (0) target = $region21
    $region20: #{tpu_custom_call.1} parent=1 // pred_region
      %s233 = ssub.s32 512, 512
      %234 = vsyncadd [#allocation4], %s233
      %s235 = sshll.u32 [#allocation7], 4
      %s236 = int_to_ptr.vmem [resolvable:$true] %s235
      %241 = dma.vmem_to_hbm [thread:$0]  %s236, 512, %s2, [#allocation4], 128, 128, 8
    $region21: #{tpu_custom_call.1} parent=1 // pred_fallthru
      _
    // Predicated region
    $region22: #{tpu_custom_call.1} parent=1 // pred_check
      _
    $region23: #{tpu_custom_call.1} parent=1 // pred_check_branch
      %243 = sbr.rel (0) target = $region25
    $region24: #{tpu_custom_call.1} parent=1 // pred_region
      %244 = dma.done [#allocation4], 512
    $region25: #{tpu_custom_call.1} parent=1 // pred_fallthru
      _
    %245 = vsyncpa [#allocation3], 1
    %246 = vsyncpa [#allocation6], 1
    %247 = vsyncpa [#allocation4], 1

</llo_original>
